<compile_context>
chip_gen: v6e
topology: v6e:2x2x1
jax: 0.10.0
libtpu: 0.0.40
codegen_flags: <defaults>
</compile_context>

<pallas_src>
import functools
import math

import jax
import jax.numpy as jnp
from jax.experimental import pallas as pl
from jax.experimental.pallas import tpu as pltpu


def _cdiv(a, b):
    return -(-a // b)


def _round_up(a, m):
    return _cdiv(a, m) * m


@functools.lru_cache(maxsize=None)
def _gen_config():
    """Per-TPU-generation tiling knobs."""
    kind = ""
    try:
        kind = jax.devices()[0].device_kind.lower()
    except Exception:
        pass
    if ("v5 lite" in kind) or ("v5e" in kind) or ("v5lite" in kind):
        # v5e: ~0.8 TB/s HBM (4 MiB blocks already ~10 us DMA), slow MXU ->
        # only lane-pack when the packed width is exactly 128.
        return dict(block_bytes=4 << 20, vmem_limit=48 << 20,
                    max_rows=8192, min_grid=1, max_pack_width=128)
    if "7" in kind:
        # v7x: 64 MiB VMEM/TC, 3.2 TB/s HBM, 2 TensorCores per chip.
        return dict(block_bytes=6 << 20, vmem_limit=56 << 20,
                    max_rows=32768, min_grid=2, max_pack_width=512)
    # v6e / default: 128 MiB physical VMEM, single TC.
    return dict(block_bytes=4 << 20, vmem_limit=64 << 20,
                max_rows=8192, min_grid=1, max_pack_width=512)


def _pick_block_rows(rows, width, cfg, budget_div=1):
    """Rows per block for a (rows, width) view (multiple of 16 or full dim)."""
    budget = max(1, cfg["block_bytes"] // budget_div)
    tm = budget // max(1, width * 4)
    tm = max(16, min(cfg["max_rows"], tm))
    tm -= tm % 16
    if cfg["min_grid"] > 1:
        # Keep >= min_grid blocks so both v7x TensorCores get work.
        cap = max(16, _round_up(_cdiv(rows, cfg["min_grid"]), 16))
        tm = min(tm, cap)
    if rows <= tm:
        return rows            # block == full dim: always layout-legal
    return tm


def _pick_cf_blocks(n, c, s, cfg):
    """(batch, spatial) block sizes for a (N, C, S) channels_first view."""
    budget = cfg["block_bytes"]
    ts = budget // max(1, c * 4)
    ts = max(128, min(16384, ts))
    ts -= ts % 128
    if s <= ts:
        ts = s
        bn = max(1, min(n, budget // max(1, c * s * 4)))
        if cfg["min_grid"] > 1 and n > cfg["min_grid"]:
            bn = min(bn, max(1, _cdiv(n, cfg["min_grid"])))
    else:
        bn = 1
    return bn, ts


# ---------------------------------------------------------------------------
# Kernel bodies
# ---------------------------------------------------------------------------

def _ln_lanes_kernel(x_ref, w_ref, b_ref, o_ref, *, eps):
    """Generic channels_last: (TM, C) tile, reduce over lanes (C)."""
    x = x_ref[...].astype(jnp.float32)
    mean = jnp.mean(x, axis=-1, keepdims=True)
    xc = x - mean
    var = jnp.mean(xc * xc, axis=-1, keepdims=True)          # biased variance
    inv = jax.lax.rsqrt(var + eps)                            # EUP slot
    y = xc * inv * w_ref[...] + b_ref[...]
    o_ref[...] = y.astype(o_ref.dtype)


def _ln_packed_kernel(x_ref, w_ref, b_ref, bd_ref, o_ref, *, eps, c):
    """Lane-packed channels_last for small C.

    x_ref: (TM, pw) with pw = lcm(C, 128); each pw-lane row carries
    g = pw // C independent C-channel rows.  Per-segment sums run on the
    otherwise-idle MXU against the exact 0/1 block-diagonal indicator
    `bd_ref`.  The f32 operand is split into a bf16-exact high part + small
    residual so two default-precision (1-pass) matmuls reproduce an
    ~f32-accurate segmented sum (the 0/1 weights are exact in bf16; the only
    error is truncating the tiny residual).  Variance uses centered values.
    """
    x = x_ref[...].astype(jnp.float32)
    bd = bd_ref[...]
    inv_c = 1.0 / c

    def seg_sum(v, split):
        if not split:
            return jnp.dot(v, bd, preferred_element_type=jnp.float32)
        v_hi = v.astype(jnp.bfloat16).astype(jnp.float32)
        v_lo = v - v_hi
        return (jnp.dot(v_hi, bd, preferred_element_type=jnp.float32)
                + jnp.dot(v_lo, bd, preferred_element_type=jnp.float32))

    # bf16 inputs are already bf16-exact: a single matmul suffices for x.
    x_needs_split = jnp.dtype(x_ref.dtype).itemsize > 2
    mean = seg_sum(x, x_needs_split) * inv_c
    xc = x - mean
    var = seg_sum(xc * xc, True) * inv_c
    inv = jax.lax.rsqrt(var + eps)                            # EUP slot
    y = xc * inv * w_ref[...] + b_ref[...]
    o_ref[...] = y.astype(o_ref.dtype)


def _ln_cf_kernel(x_ref, w_ref, b_ref, o_ref, *, eps):
    """channels_first: (BN, C, TS) tile, C on sublanes, spatial on lanes."""
    x = x_ref[...].astype(jnp.float32)
    mean = jnp.mean(x, axis=1, keepdims=True)                 # sublane reduce
    xc = x - mean
    var = jnp.mean(xc * xc, axis=1, keepdims=True)
    inv = jax.lax.rsqrt(var + eps)
    y = xc * inv * w_ref[...] + b_ref[...]
    o_ref[...] = y.astype(o_ref.dtype)


# ---------------------------------------------------------------------------
# pallas_call wrappers
# ---------------------------------------------------------------------------

def _layernorm_rows_plain(x2d, weight, bias, eps, cfg):
    rows, c = x2d.shape
    tm = _pick_block_rows(rows, c, cfg)
    w2 = weight.astype(jnp.float32).reshape(1, c)
    b2 = bias.astype(jnp.float32).reshape(1, c)
    return pl.pallas_call(
        functools.partial(_ln_lanes_kernel, eps=eps),
        out_shape=jax.ShapeDtypeStruct((rows, c), x2d.dtype),
        grid_spec=pltpu.PrefetchScalarGridSpec(
            num_scalar_prefetch=0,
            grid=(_cdiv(rows, tm),),
            in_specs=[
                pl.BlockSpec((tm, c), lambda i: (i, 0)),
                pl.BlockSpec((1, c), lambda i: (0, 0)),
                pl.BlockSpec((1, c), lambda i: (0, 0)),
            ],
            out_specs=pl.BlockSpec((tm, c), lambda i: (i, 0)),
        ),
        compiler_params=pltpu.CompilerParams(
            dimension_semantics=("parallel",),
            vmem_limit_bytes=cfg["vmem_limit"]),
    )(x2d, w2, b2)


def _layernorm_rows_packed(x2d, weight, bias, eps, g, pw, cfg):
    rows, c = x2d.shape
    r = rows // g
    xp = x2d.reshape(r, pw)                          # free contiguous reshape
    wp = jnp.tile(weight.astype(jnp.float32), g).reshape(1, pw)
    bp = jnp.tile(bias.astype(jnp.float32), g).reshape(1, pw)
    seg = jnp.arange(pw, dtype=jnp.int32) // c
    bd = (seg[:, None] == seg[None, :]).astype(jnp.float32)   # exact 0/1
    # Halved block budget: the matmul temporaries (mean/xc/var) are full-size
    # f32 blocks that also live in VMEM.
    tm = _pick_block_rows(r, pw, cfg, budget_div=2)
    out = pl.pallas_call(
        functools.partial(_ln_packed_kernel, eps=eps, c=c),
        out_shape=jax.ShapeDtypeStruct((r, pw), x2d.dtype),
        grid_spec=pltpu.PrefetchScalarGridSpec(
            num_scalar_prefetch=0,
            grid=(_cdiv(r, tm),),
            in_specs=[
                pl.BlockSpec((tm, pw), lambda i: (i, 0)),
                pl.BlockSpec((1, pw), lambda i: (0, 0)),
                pl.BlockSpec((1, pw), lambda i: (0, 0)),
                pl.BlockSpec((pw, pw), lambda i: (0, 0)),
            ],
            out_specs=pl.BlockSpec((tm, pw), lambda i: (i, 0)),
        ),
        compiler_params=pltpu.CompilerParams(
            dimension_semantics=("parallel",),
            vmem_limit_bytes=cfg["vmem_limit"]),
    )(xp, wp, bp, bd)
    return out.reshape(rows, c)


def _layernorm_rows(x2d, weight, bias, eps, cfg):
    rows, c = x2d.shape
    if rows > 0 and c % 128 != 0:
        pw = (c * 128) // math.gcd(c, 128)           # lcm(c, 128)
        g = pw // c
        if pw <= cfg["max_pack_width"] and rows % g == 0:
            return _layernorm_rows_packed(x2d, weight, bias, eps, g, pw, cfg)
    # TODO(synk): rows not divisible by g (odd batch) falls back to the
    # lane-sparse plain path; still correct, just masked stores for C<128.
    return _layernorm_rows_plain(x2d, weight, bias, eps, cfg)


def _layernorm_channels_first(x3d, weight, bias, eps, cfg):
    n, c, s = x3d.shape
    bn, ts = _pick_cf_blocks(n, c, s, cfg)
    w3 = weight.astype(jnp.float32).reshape(1, c, 1)
    b3 = bias.astype(jnp.float32).reshape(1, c, 1)
    return pl.pallas_call(
        functools.partial(_ln_cf_kernel, eps=eps),
        out_shape=jax.ShapeDtypeStruct((n, c, s), x3d.dtype),
        grid_spec=pltpu.PrefetchScalarGridSpec(
            num_scalar_prefetch=0,
            grid=(_cdiv(n, bn), _cdiv(s, ts)),
            in_specs=[
                pl.BlockSpec((bn, c, ts), lambda i, j: (i, 0, j)),
                pl.BlockSpec((1, c, 1), lambda i, j: (0, 0, 0)),
                pl.BlockSpec((1, c, 1), lambda i, j: (0, 0, 0)),
            ],
            out_specs=pl.BlockSpec((bn, c, ts), lambda i, j: (i, 0, j)),
        ),
        compiler_params=pltpu.CompilerParams(
            dimension_semantics=("parallel", "parallel"),
            vmem_limit_bytes=cfg["vmem_limit"]),
    )(x3d, w3, b3)


# ---------------------------------------------------------------------------
# Module
# ---------------------------------------------------------------------------

class LayerNorm:
    """JAX/Pallas port of the ConvNeXt LayerNorm module."""

    def __init__(self, normalized_shape, eps=1e-6, data_format="channels_last"):
        if data_format not in ("channels_last", "channels_first"):
            raise NotImplementedError
        self.weight = jnp.ones((normalized_shape,), jnp.float32)
        self.bias = jnp.zeros((normalized_shape,), jnp.float32)
        self.eps = eps
        self.data_format = data_format
        self.normalized_shape = (normalized_shape,)

    def __call__(self, x):
        cfg = _gen_config()
        c = self.normalized_shape[0]
        if self.data_format == "channels_last":
            assert x.shape[-1] == c
            lead = x.shape[:-1]
            x2d = x.reshape(-1, c)                   # free contiguous reshape
            y = _layernorm_rows(x2d, self.weight, self.bias, self.eps, cfg)
            return y.reshape(*lead, c)
        else:  # channels_first: (N, C, *spatial), normalize over axis 1
            assert x.shape[1] == c
            n = x.shape[0]
            s = 1
            for d in x.shape[2:]:
                s *= d
            x3 = x.reshape(n, c, s)                  # free contiguous reshape
            y = _layernorm_channels_first(x3, self.weight, self.bias, self.eps, cfg)
            return y.reshape(x.shape)


# ---------------------------------------------------------------------------
# References & test
# ---------------------------------------------------------------------------

def _ref_channels_last(x, w, b, eps):
    x = x.astype(jnp.float32)
    mean = jnp.mean(x, axis=-1, keepdims=True)
    var = jnp.mean((x - mean) ** 2, axis=-1, keepdims=True)
    return (x - mean) / jnp.sqrt(var + eps) * w + b


def _ref_channels_first(x, w, b, eps):
    x = x.astype(jnp.float32)
    u = jnp.mean(x, axis=1, keepdims=True)
    s = jnp.mean((x - u) ** 2, axis=1, keepdims=True)
    xn = (x - u) / jnp.sqrt(s + eps)
    return w[:, None, None] * xn + b[:, None, None]


if __name__ == "__main__":
    key = jax.random.PRNGKey(0)
    k1, k2, k3, k4, k5 = jax.random.split(key, 5)

    # channels_last, C=32 -> lane-packed MXU-moments path (pw=128, g=4)
    ln_last = LayerNorm(32, eps=1e-6, data_format="channels_last")
    ln_last.weight = jnp.linspace(0.5, 1.5, 32, dtype=jnp.float32)
    ln_last.bias = jnp.linspace(-0.1, 0.1, 32, dtype=jnp.float32)
    x_last = jax.random.normal(k1, (2, 16, 16, 32), jnp.float32)
    y_last = jax.block_until_ready(ln_last(x_last))
    y_last_ref = _ref_channels_last(x_last, ln_last.weight, ln_last.bias, 1e-6)
    assert jnp.allclose(y_last, y_last_ref, atol=2e-5, rtol=2e-5)

    # channels_first, C=4 -> transpose-free sublane-reduction path (bn blocking)
    ln_first = LayerNorm(4, eps=1e-6, data_format="channels_first")
    ln_first.weight = jnp.array([1.0, 0.5, 2.0, 1.5], jnp.float32)
    ln_first.bias = jnp.array([0.0, 0.1, -0.1, 0.2], jnp.float32)
    x_first = jax.random.normal(k2, (2, 4, 16, 16), jnp.float32)
    y_first = jax.block_until_ready(ln_first(x_first))
    y_first_ref = _ref_channels_first(x_first, ln_first.weight, ln_first.bias, 1e-6)
    assert jnp.allclose(y_first, y_first_ref, atol=2e-5, rtol=2e-5)

    # channels_last, C=96 (ConvNeXt stem) -> packed pw=384 (plain path on v5e)
    ln_g = LayerNorm(96, eps=1e-6, data_format="channels_last")
    ln_g.weight = jnp.linspace(0.8, 1.2, 96, dtype=jnp.float32)
    ln_g.bias = jnp.linspace(-0.05, 0.05, 96, dtype=jnp.float32)
    x_g = jax.random.normal(k3, (2, 8, 8, 96), jnp.float32)
    y_g = jax.block_until_ready(ln_g(x_g))
    y_g_ref = _ref_channels_last(x_g, ln_g.weight, ln_g.bias, 1e-6)
    assert jnp.allclose(y_g, y_g_ref, atol=2e-5, rtol=2e-5)

    # channels_last, C=128 -> plain lane-reduction path (lane-dense already)
    ln_p = LayerNorm(128, eps=1e-6, data_format="channels_last")
    ln_p.weight = jnp.linspace(0.9, 1.1, 128, dtype=jnp.float32)
    ln_p.bias = jnp.linspace(-0.02, 0.02, 128, dtype=jnp.float32)
    x_p = jax.random.normal(k4, (2, 4, 4, 128), jnp.float32)
    y_p = jax.block_until_ready(ln_p(x_p))
    y_p_ref = _ref_channels_last(x_p, ln_p.weight, ln_p.bias, 1e-6)
    assert jnp.allclose(y_p, y_p_ref, atol=2e-5, rtol=2e-5)

    # channels_last, bf16 activations (native-dtype I/O), C=64 -> packed pw=128
    ln_bf = LayerNorm(64, eps=1e-6, data_format="channels_last")
    ln_bf.weight = jnp.linspace(0.7, 1.3, 64, dtype=jnp.float32)
    ln_bf.bias = jnp.linspace(-0.1, 0.1, 64, dtype=jnp.float32)
    x_bf = jax.random.normal(k5, (2, 8, 8, 64), jnp.float32).astype(jnp.bfloat16)
    y_bf = jax.block_until_ready(ln_bf(x_bf))
    assert y_bf.dtype == jnp.bfloat16
    y_bf_ref = _ref_channels_last(x_bf, ln_bf.weight, ln_bf.bias, 1e-6)
    assert jnp.allclose(y_bf.astype(jnp.float32), y_bf_ref, atol=2e-2, rtol=2e-2)

    print("KERNEL_OK")
</pallas_src>

<mosaic_0001>
module attributes {stable_mosaic.version = 11 : i64} {
  func.func @_ln_packed_kernel(%arg0: i32, %arg1: memref<128x128xf32, #tpu.memory_space<vmem>>, %arg2: memref<1x128xf32, #tpu.memory_space<vmem>>, %arg3: memref<1x128xf32, #tpu.memory_space<vmem>>, %arg4: memref<128x128xf32, #tpu.memory_space<vmem>>, %arg5: memref<128x128xf32, #tpu.memory_space<vmem>>) attributes {dimension_semantics = [#tpu.dimension_semantics<parallel>], iteration_bounds = array<i64: 1>, scalar_prefetch = 0 : i64, scratch_operands = 0 : i64, tpu.core_type = #tpu.core_type<tc>, window_params = [{transform_indices = @transform_0, window_bounds = array<i64: 128, 128>}, {pipeline_mode = #tpu.pipeline_mode<synchronous>, transform_indices = @transform_1, window_bounds = array<i64: 1, 128>}, {pipeline_mode = #tpu.pipeline_mode<synchronous>, transform_indices = @transform_2, window_bounds = array<i64: 1, 128>}, {pipeline_mode = #tpu.pipeline_mode<synchronous>, transform_indices = @transform_3, window_bounds = array<i64: 128, 128>}, {transform_indices = @transform_4, window_bounds = array<i64: 128, 128>}]} {
    %c0 = arith.constant 0 : index
    %c0_0 = arith.constant 0 : index
    %0 = vector.load %arg1[%c0, %c0_0] : memref<128x128xf32, #tpu.memory_space<vmem>>, vector<128x128xf32>
    %c0_1 = arith.constant 0 : index
    %c0_2 = arith.constant 0 : index
    %1 = vector.load %arg4[%c0_1, %c0_2] : memref<128x128xf32, #tpu.memory_space<vmem>>, vector<128x128xf32>
    %2 = arith.truncf %0 : vector<128x128xf32> to vector<128x128xbf16>
    %3 = arith.extf %2 : vector<128x128xbf16> to vector<128x128xf32>
    %4 = arith.subf %0, %3 : vector<128x128xf32>
    %cst = arith.constant dense<0.000000e+00> : vector<128x128xf32>
    %5 = tpu.matmul %3, %1, %cst {dimension_numbers = #tpu.dot_dimension_numbers<[1], [0], [0], [1], [0, 0, 1, 1], [], []>} : vector<128x128xf32>, vector<128x128xf32>, vector<128x128xf32> -> vector<128x128xf32>
    %cst_3 = arith.constant dense<0.000000e+00> : vector<128x128xf32>
    %6 = tpu.matmul %4, %1, %cst_3 {dimension_numbers = #tpu.dot_dimension_numbers<[1], [0], [0], [1], [0, 0, 1, 1], [], []>} : vector<128x128xf32>, vector<128x128xf32>, vector<128x128xf32> -> vector<128x128xf32>
    %7 = arith.addf %5, %6 : vector<128x128xf32>
    %cst_4 = arith.constant 3.125000e-02 : f32
    %8 = vector.broadcast %cst_4 : f32 to vector<128x128xf32>
    %9 = arith.mulf %7, %8 : vector<128x128xf32>
    %10 = arith.subf %0, %9 : vector<128x128xf32>
    %11 = arith.mulf %10, %10 : vector<128x128xf32>
    %12 = arith.truncf %11 : vector<128x128xf32> to vector<128x128xbf16>
    %13 = arith.extf %12 : vector<128x128xbf16> to vector<128x128xf32>
    %14 = arith.subf %11, %13 : vector<128x128xf32>
    %cst_5 = arith.constant dense<0.000000e+00> : vector<128x128xf32>
    %15 = tpu.matmul %13, %1, %cst_5 {dimension_numbers = #tpu.dot_dimension_numbers<[1], [0], [0], [1], [0, 0, 1, 1], [], []>} : vector<128x128xf32>, vector<128x128xf32>, vector<128x128xf32> -> vector<128x128xf32>
    %cst_6 = arith.constant dense<0.000000e+00> : vector<128x128xf32>
    %16 = tpu.matmul %14, %1, %cst_6 {dimension_numbers = #tpu.dot_dimension_numbers<[1], [0], [0], [1], [0, 0, 1, 1], [], []>} : vector<128x128xf32>, vector<128x128xf32>, vector<128x128xf32> -> vector<128x128xf32>
    %17 = arith.addf %15, %16 : vector<128x128xf32>
    %cst_7 = arith.constant 3.125000e-02 : f32
    %18 = vector.broadcast %cst_7 : f32 to vector<128x128xf32>
    %19 = arith.mulf %17, %18 : vector<128x128xf32>
    %cst_8 = arith.constant 9.99999997E-7 : f32
    %20 = vector.broadcast %cst_8 : f32 to vector<128x128xf32>
    %21 = arith.addf %19, %20 : vector<128x128xf32>
    %22 = math.rsqrt %21 : vector<128x128xf32>
    %23 = arith.mulf %10, %22 : vector<128x128xf32>
    %c0_9 = arith.constant 0 : index
    %c0_10 = arith.constant 0 : index
    %24 = vector.load %arg2[%c0_9, %c0_10] : memref<1x128xf32, #tpu.memory_space<vmem>>, vector<1x128xf32>
    %25 = vector.broadcast %24 : vector<1x128xf32> to vector<128x128xf32>
    %26 = arith.mulf %23, %25 : vector<128x128xf32>
    %c0_11 = arith.constant 0 : index
    %c0_12 = arith.constant 0 : index
    %27 = vector.load %arg3[%c0_11, %c0_12] : memref<1x128xf32, #tpu.memory_space<vmem>>, vector<1x128xf32>
    %28 = vector.broadcast %27 : vector<1x128xf32> to vector<128x128xf32>
    %29 = arith.addf %26, %28 : vector<128x128xf32>
    %c0_13 = arith.constant 0 : index
    %c0_14 = arith.constant 0 : index
    %30 = vector.load %arg5[%c0_13, %c0_14] : memref<128x128xf32, #tpu.memory_space<vmem>>, vector<128x128xf32>
    tpu.vector_store %arg5[%c0_13, %c0_14], %29 {strides = array<i32>} : memref<128x128xf32, #tpu.memory_space<vmem>>, vector<128x128xf32>,
    return
  }
  func.func @transform_0(%arg0: i32) -> (i32, i32) {
    %c0_i32 = arith.constant 0 : i32
    %c0_i32_0 = arith.constant 0 : i32
    return %arg0, %c0_i32 : i32, i32
  }
  func.func @transform_1(%arg0: i32) -> (i32, i32) {
    %c0_i32 = arith.constant 0 : i32
    %c0_i32_0 = arith.constant 0 : i32
    %c0_i32_1 = arith.constant 0 : i32
    return %c0_i32, %c0_i32_0 : i32, i32
  }
  func.func @transform_2(%arg0: i32) -> (i32, i32) {
    %c0_i32 = arith.constant 0 : i32
    %c0_i32_0 = arith.constant 0 : i32
    %c0_i32_1 = arith.constant 0 : i32
    return %c0_i32, %c0_i32_0 : i32, i32
  }
  func.func @transform_3(%arg0: i32) -> (i32, i32) {
    %c0_i32 = arith.constant 0 : i32
    %c0_i32_0 = arith.constant 0 : i32
    %c0_i32_1 = arith.constant 0 : i32
    return %c0_i32, %c0_i32_0 : i32, i32
  }
  func.func @transform_4(%arg0: i32) -> (i32, i32) {
    %c0_i32 = arith.constant 0 : i32
    %c0_i32_0 = arith.constant 0 : i32
    return %arg0, %c0_i32 : i32, i32
  }
}

</mosaic_0001>

<llo_original>
// kernel: tpu_custom_call.1
$region0: #{tpu_custom_call.1}
  #allocation0 [shape = 'u32[]', space=smem, size = 0x4, offset = 0x4, fixed_abs, tag = 'smem constant byte address 0x4 - core index']
  #allocation1 [shape = 'u32[144,128]{1,0:T(1,128)}', space=vmem, size = 0x12000, scoped, tag = 'internal scratch']
  %s0 = inlined_call_operand.hbm [shape: f32[128,128], index: 0, kind: input, shape index: {}]
  %s1 = inlined_call_operand.vmem [shape: f32[1,128], index: 1, kind: input, shape index: {}]
  %s2 = inlined_call_operand.vmem [shape: f32[1,128], index: 2, kind: input, shape index: {}]
  %s3 = inlined_call_operand.hbm [shape: f32[128,128], index: 3, kind: input, shape index: {}]
  %s4 = inlined_call_operand.hbm [shape: f32[128,128], index: 4, kind: output, shape index: {}]
  %s5 = sld [smem:[#allocation0]]
  $region34: #{tpu_custom_call.1} parent=0
    _
  %s7 = ssub.s32 1, %s5
  %s8 = scalar_select 0, %s7, %s5
  $region1: #{tpu_custom_call.1} parent=0
    #allocation2 [shape = 'u8[65536]{0}', space=vmem, size = 0x10000, scoped, tag = 'input window, operand 0, single buffered']
    #allocation3 [shape = 's32[1]{0}', space=sflag, size = 0x4, scoped, tag = 'scoped memory for tpu_custom_call.1']
    #allocation4 [shape = 's32[1]{0}', space=sflag, size = 0x4, scoped, tag = 'scoped memory for tpu_custom_call.1']
    #allocation5 [shape = 'u8[65536]{0}', space=vmem, size = 0x10000, scoped, tag = 'input window, operand 3, single buffered']
    #allocation6 [shape = 's32[1]{0}', space=sflag, size = 0x4, scoped, tag = 'scoped memory for tpu_custom_call.1']
    #allocation7 [shape = 'u8[65536]{0}', space=vmem, size = 0x10000, scoped, tag = 'output window, operand 0, single buffered']
    %9 = vsyncpa [#allocation3], 0
    %10 = vsyncpa [#allocation6], 0
    %11 = vsyncpa [#allocation4], 0
    // Predicated region
    $region2: #{tpu_custom_call.1} parent=1 // pred_check
      _
    $region3: #{tpu_custom_call.1} parent=1 // pred_check_branch
      %13 = sbr.rel (0) target = $region5
    $region4: #{tpu_custom_call.1} parent=1 // pred_region
      %s15 = ssub.s32 2048, 2048
      %16 = vsyncadd [#allocation3], %s15
      %s17 = sshll.u32 [#allocation2], 4
      %s18 = int_to_ptr.vmem [resolvable:$true] %s17
      %23 = dma.hbm_to_vmem [thread:$0]  %s0, 2048, %s18, [#allocation3], 128, 128, 8
    $region5: #{tpu_custom_call.1} parent=1 // pred_fallthru
      _
    // Predicated region
    $region6: #{tpu_custom_call.1} parent=1 // pred_check
      _
    $region7: #{tpu_custom_call.1} parent=1 // pred_check_branch
      %25 = sbr.rel (0) target = $region9
    $region8: #{tpu_custom_call.1} parent=1 // pred_region
      _
    $region9: #{tpu_custom_call.1} parent=1 // pred_fallthru
      _
    // Predicated region
    $region10: #{tpu_custom_call.1} parent=1 // pred_check
      _
    $region11: #{tpu_custom_call.1} parent=1 // pred_check_branch
      %27 = sbr.rel (0) target = $region13
    $region12: #{tpu_custom_call.1} parent=1 // pred_region
      _
    $region13: #{tpu_custom_call.1} parent=1 // pred_fallthru
      _
    // Predicated region
    $region14: #{tpu_custom_call.1} parent=1 // pred_check
      _
    $region15: #{tpu_custom_call.1} parent=1 // pred_check_branch
      %29 = sbr.rel (0) target = $region17
    $region16: #{tpu_custom_call.1} parent=1 // pred_region
      %s31 = ssub.s32 2048, 2048
      %32 = vsyncadd [#allocation6], %s31
      %s33 = sshll.u32 [#allocation5], 4
      %s34 = int_to_ptr.vmem [resolvable:$true] %s33
      %39 = dma.hbm_to_vmem [thread:$0]  %s3, 2048, %s34, [#allocation6], 128, 128, 8
    $region17: #{tpu_custom_call.1} parent=1 // pred_fallthru
      _
    // Predicated region
    $region18: #{tpu_custom_call.1} parent=1 // pred_check
      _
    $region19: #{tpu_custom_call.1} parent=1 // pred_check_branch
      %41 = sbr.rel (0) target = $region21
    $region20: #{tpu_custom_call.1} parent=1 // pred_region
      %42 = dma.done [#allocation3], 2048
    $region21: #{tpu_custom_call.1} parent=1 // pred_fallthru
      _
    // Predicated region
    $region22: #{tpu_custom_call.1} parent=1 // pred_check
      _
    $region23: #{tpu_custom_call.1} parent=1 // pred_check_branch
      %44 = sbr.rel (0) target = $region25
    $region24: #{tpu_custom_call.1} parent=1 // pred_region
      %45 = dma.done [#allocation6], 2048
    $region25: #{tpu_custom_call.1} parent=1 // pred_fallthru
      _
    %v46 = vld [vmem:[#allocation2] sm:$0xff]
    %v47 = vld [vmem:[#allocation2 + $0x8] sm:$0xff]
    %v48 = vld [vmem:[#allocation2 + $0x10] sm:$0xff]
    %v49 = vld [vmem:[#allocation2 + $0x18] sm:$0xff]
    %v50 = vld [vmem:[#allocation2 + $0x20] sm:$0xff]
    %v51 = vld [vmem:[#allocation2 + $0x28] sm:$0xff]
    %v52 = vld [vmem:[#allocation2 + $0x30] sm:$0xff]
    %v53 = vld [vmem:[#allocation2 + $0x38] sm:$0xff]
    %v54 = vld [vmem:[#allocation2 + $0x40] sm:$0xff]
    %v55 = vld [vmem:[#allocation2 + $0x48] sm:$0xff]
    %v56 = vld [vmem:[#allocation2 + $0x50] sm:$0xff]
    %v57 = vld [vmem:[#allocation2 + $0x58] sm:$0xff]
    %v58 = vld [vmem:[#allocation2 + $0x60] sm:$0xff]
    %v59 = vld [vmem:[#allocation2 + $0x68] sm:$0xff]
    %v60 = vld [vmem:[#allocation2 + $0x70] sm:$0xff]
    %v61 = vld [vmem:[#allocation2 + $0x78] sm:$0xff]
    %v62 = vld [vmem:[#allocation5] sm:$0xff]
    %v63 = vld [vmem:[#allocation5 + $0x8] sm:$0xff]
    %v64 = vld [vmem:[#allocation5 + $0x10] sm:$0xff]
    %v65 = vld [vmem:[#allocation5 + $0x18] sm:$0xff]
    %v66 = vld [vmem:[#allocation5 + $0x20] sm:$0xff]
    %v67 = vld [vmem:[#allocation5 + $0x28] sm:$0xff]
    %v68 = vld [vmem:[#allocation5 + $0x30] sm:$0xff]
    %v69 = vld [vmem:[#allocation5 + $0x38] sm:$0xff]
    %v70 = vld [vmem:[#allocation5 + $0x40] sm:$0xff]
    %v71 = vld [vmem:[#allocation5 + $0x48] sm:$0xff]
    %v72 = vld [vmem:[#allocation5 + $0x50] sm:$0xff]
    %v73 = vld [vmem:[#allocation5 + $0x58] sm:$0xff]
    %v74 = vld [vmem:[#allocation5 + $0x60] sm:$0xff]
    %v75 = vld [vmem:[#allocation5 + $0x68] sm:$0xff]
    %v76 = vld [vmem:[#allocation5 + $0x70] sm:$0xff]
    %v77 = vld [vmem:[#allocation5 + $0x78] sm:$0xff]
    %v78 = vpack.c.bf16 %v47, %v46
    %v79 = vpack.c.bf16 %v49, %v48
    %v80 = vpack.c.bf16 %v51, %v50
    %v81 = vpack.c.bf16 %v53, %v52
    %v82 = vpack.c.bf16 %v55, %v54
    %v83 = vpack.c.bf16 %v57, %v56
    %v84 = vpack.c.bf16 %v59, %v58
    %v85 = vpack.c.bf16 %v61, %v60
    %v86 = vunpack.c.l.bf16 %v78
    %v87 = vunpack.c.h.bf16 %v78
    %v88 = vunpack.c.l.bf16 %v79
    %v89 = vunpack.c.h.bf16 %v79
    %v90 = vunpack.c.l.bf16 %v80
    %v91 = vunpack.c.h.bf16 %v80
    %v92 = vunpack.c.l.bf16 %v81
    %v93 = vunpack.c.h.bf16 %v81
    %v94 = vunpack.c.l.bf16 %v82
    %v95 = vunpack.c.h.bf16 %v82
    %v96 = vunpack.c.l.bf16 %v83
    %v97 = vunpack.c.h.bf16 %v83
    %v98 = vunpack.c.l.bf16 %v84
    %v99 = vunpack.c.h.bf16 %v84
    %v100 = vunpack.c.l.bf16 %v85
    %v101 = vunpack.c.h.bf16 %v85
    %v102 = vsub.f32 %v46, %v86
    %v103 = vsub.f32 %v47, %v87
    %v104 = vsub.f32 %v48, %v88
    %v105 = vsub.f32 %v49, %v89
    %v106 = vsub.f32 %v50, %v90
    %v107 = vsub.f32 %v51, %v91
    %v108 = vsub.f32 %v52, %v92
    %v109 = vsub.f32 %v53, %v93
    %v110 = vsub.f32 %v54, %v94
    %v111 = vsub.f32 %v55, %v95
    %v112 = vsub.f32 %v56, %v96
    %v113 = vsub.f32 %v57, %v97
    %v114 = vsub.f32 %v58, %v98
    %v115 = vsub.f32 %v59, %v99
    %v116 = vsub.f32 %v60, %v100
    %v117 = vsub.f32 %v61, %v101
    %118 = vmatprep.subr.mxu0 0.0
    %119 = vmatpush1.msra.mxu0 %v77
    %120 = vmatprep.subr.mxu0 0.0
    %121 = vmatpush1.msra.mxu0 %v76
    %122 = vmatprep.subr.mxu0 0.0
    %123 = vmatpush1.msra.mxu0 %v75
    %124 = vmatprep.subr.mxu0 0.0
    %125 = vmatpush1.msra.mxu0 %v74
    %126 = vmatprep.subr.mxu0 0.0
    %127 = vmatpush1.msra.mxu0 %v73
    %128 = vmatprep.subr.mxu0 0.0
    %129 = vmatpush1.msra.mxu0 %v72
    %130 = vmatprep.subr.mxu0 0.0
    %131 = vmatpush1.msra.mxu0 %v71
    %132 = vmatprep.subr.mxu0 0.0
    %133 = vmatpush1.msra.mxu0 %v70
    %134 = vmatprep.subr.mxu0 0.0
    %135 = vmatpush1.msra.mxu0 %v69
    %136 = vmatprep.subr.mxu0 0.0
    %137 = vmatpush1.msra.mxu0 %v68
    %138 = vmatprep.subr.mxu0 0.0
    %139 = vmatpush1.msra.mxu0 %v67
    %140 = vmatprep.subr.mxu0 0.0
    %141 = vmatpush1.msra.mxu0 %v66
    %142 = vmatprep.subr.mxu0 0.0
    %143 = vmatpush1.msra.mxu0 %v65
    %144 = vmatprep.subr.mxu0 0.0
    %145 = vmatpush1.msra.mxu0 %v64
    %146 = vmatprep.subr.mxu0 0.0
    %147 = vmatpush1.msra.mxu0 %v63
    %148 = vmatprep.subr.mxu0 0.0
    %149 = vmatpush1.msra.mxu0 %v62
    %150 = vmatprep.subr.mxu0 0.0
    %151 = vmatpush2.msra.mxu0 0.0
    %152 = vmatprep.subr.mxu0 0.0
    %153 = vmatpush2.msra.mxu0 0.0
    %154 = vmatprep.subr.mxu0 0.0
    %155 = vmatpush2.msra.mxu0 0.0
    %156 = vmatprep.subr.mxu0 0.0
    %157 = vmatpush2.msra.mxu0 0.0
    %158 = vmatprep.subr.mxu0 0.0
    %159 = vmatpush2.msra.mxu0 0.0
    %160 = vmatprep.subr.mxu0 0.0
    %161 = vmatpush2.msra.mxu0 0.0
    %162 = vmatprep.subr.mxu0 0.0
    %163 = vmatpush2.msra.mxu0 0.0
    %164 = vmatprep.subr.mxu0 0.0
    %165 = vmatpush2.msra.mxu0 0.0
    %166 = vmatprep.subr.mxu0 0.0
    %167 = vmatpush2.msra.mxu0 0.0
    %168 = vmatprep.subr.mxu0 0.0
    %169 = vmatpush2.msra.mxu0 0.0
    %170 = vmatprep.subr.mxu0 0.0
    %171 = vmatpush2.msra.mxu0 0.0
    %172 = vmatprep.subr.mxu0 0.0
    %173 = vmatpush2.msra.mxu0 0.0
    %174 = vmatprep.subr.mxu0 0.0
    %175 = vmatpush2.msra.mxu0 0.0
    %176 = vmatprep.subr.mxu0 0.0
    %177 = vmatpush2.msra.mxu0 0.0
    %178 = vmatprep.subr.mxu0 0.0
    %179 = vmatpush2.msra.mxu0 0.0
    %180 = vmatprep.subr.mxu0 0.0
    %181 = vmatpush2.msra.mxu0 0.0
    %182 = vmatprep.mubr.f32.mxu0 0.0
    %183 = vmatmul.mubr.f32.gmra.mxu0 %v102
    %v184 = vpop.f32.mrf.mxu0
    %v185 = vadd.f32 0.0, %v184
    %v186 = vpop.f32.mrf.mxu0
    %187 = vmatprep.mubr.f32.mxu0 0.0
    %188 = vmatmul.mubr.f32.gmra.mxu0 %v103
    %v189 = vpop.f32.mrf.mxu0
    %v190 = vadd.f32 0.0, %v189
    %v191 = vpop.f32.mrf.mxu0
    %192 = vmatprep.mubr.f32.mxu0 0.0
    %193 = vmatmul.mubr.f32.gmra.mxu0 %v104
    %v194 = vpop.f32.mrf.mxu0
    %v195 = vadd.f32 0.0, %v194
    %v196 = vpop.f32.mrf.mxu0
    %197 = vmatprep.mubr.f32.mxu0 0.0
    %198 = vmatmul.mubr.f32.gmra.mxu0 %v105
    %v199 = vpop.f32.mrf.mxu0
    %v200 = vadd.f32 0.0, %v199
    %v201 = vpop.f32.mrf.mxu0
    %202 = vmatprep.mubr.f32.mxu0 0.0
    %203 = vmatmul.mubr.f32.gmra.mxu0 %v106
    %v204 = vpop.f32.mrf.mxu0
    %v205 = vadd.f32 0.0, %v204
    %v206 = vpop.f32.mrf.mxu0
    %207 = vmatprep.mubr.f32.mxu0 0.0
    %208 = vmatmul.mubr.f32.gmra.mxu0 %v107
    %v209 = vpop.f32.mrf.mxu0
    %v210 = vadd.f32 0.0, %v209
    %v211 = vpop.f32.mrf.mxu0
    %212 = vmatprep.mubr.f32.mxu0 0.0
    %213 = vmatmul.mubr.f32.gmra.mxu0 %v108
    %v214 = vpop.f32.mrf.mxu0
    %v215 = vadd.f32 0.0, %v214
    %v216 = vpop.f32.mrf.mxu0
    %217 = vmatprep.mubr.f32.mxu0 0.0
    %218 = vmatmul.mubr.f32.gmra.mxu0 %v109
    %v219 = vpop.f32.mrf.mxu0
    %v220 = vadd.f32 0.0, %v219
    %v221 = vpop.f32.mrf.mxu0
    %222 = vmatprep.mubr.f32.mxu0 0.0
    %223 = vmatmul.mubr.f32.gmra.mxu0 %v110
    %v224 = vpop.f32.mrf.mxu0
    %v225 = vadd.f32 0.0, %v224
    %v226 = vpop.f32.mrf.mxu0
    %227 = vmatprep.mubr.f32.mxu0 0.0
    %228 = vmatmul.mubr.f32.gmra.mxu0 %v111
    %v229 = vpop.f32.mrf.mxu0
    %v230 = vadd.f32 0.0, %v229
    %v231 = vpop.f32.mrf.mxu0
    %232 = vmatprep.mubr.f32.mxu0 0.0
    %233 = vmatmul.mubr.f32.gmra.mxu0 %v112
    %v234 = vpop.f32.mrf.mxu0
    %v235 = vadd.f32 0.0, %v234
    %v236 = vpop.f32.mrf.mxu0
    %237 = vmatprep.mubr.f32.mxu0 0.0
    %238 = vmatmul.mubr.f32.gmra.mxu0 %v113
    %v239 = vpop.f32.mrf.mxu0
    %v240 = vadd.f32 0.0, %v239
    %v241 = vpop.f32.mrf.mxu0
    %242 = vmatprep.mubr.f32.mxu0 0.0
    %243 = vmatmul.mubr.f32.gmra.mxu0 %v114
    %v244 = vpop.f32.mrf.mxu0
    %v245 = vadd.f32 0.0, %v244
    %v246 = vpop.f32.mrf.mxu0
    %247 = vmatprep.mubr.f32.mxu0 0.0
    %248 = vmatmul.mubr.f32.gmra.mxu0 %v115
    %v249 = vpop.f32.mrf.mxu0
    %v250 = vadd.f32 0.0, %v249
    %v251 = vpop.f32.mrf.mxu0
    %252 = vmatprep.mubr.f32.mxu0 0.0
    %253 = vmatmul.mubr.f32.gmra.mxu0 %v116
    %v254 = vpop.f32.mrf.mxu0
    %v255 = vadd.f32 0.0, %v254
    %v256 = vpop.f32.mrf.mxu0
    %257 = vmatprep.mubr.f32.mxu0 0.0
    %258 = vmatmul.mubr.f32.gmra.mxu0 %v117
    %v259 = vpop.f32.mrf.mxu0
    %v260 = vadd.f32 0.0, %v259
    %v261 = vpop.f32.mrf.mxu0
    %262 = vdwg.mxu0
    %263 = vmatprep.subr.mxu0 0.0
    %264 = vmatpush1.msra.mxu0 %v77
    %265 = vmatprep.subr.mxu0 0.0
    %266 = vmatpush1.msra.mxu0 %v76
    %267 = vmatprep.subr.mxu0 0.0
    %268 = vmatpush1.msra.mxu0 %v75
    %269 = vmatprep.subr.mxu0 0.0
    %270 = vmatpush1.msra.mxu0 %v74
    %271 = vmatprep.subr.mxu0 0.0
    %272 = vmatpush1.msra.mxu0 %v73
    %273 = vmatprep.subr.mxu0 0.0
    %274 = vmatpush1.msra.mxu0 %v72
    %275 = vmatprep.subr.mxu0 0.0
    %276 = vmatpush1.msra.mxu0 %v71
    %277 = vmatprep.subr.mxu0 0.0
    %278 = vmatpush1.msra.mxu0 %v70
    %279 = vmatprep.subr.mxu0 0.0
    %280 = vmatpush1.msra.mxu0 %v69
    %281 = vmatprep.subr.mxu0 0.0
    %282 = vmatpush1.msra.mxu0 %v68
    %283 = vmatprep.subr.mxu0 0.0
    %284 = vmatpush1.msra.mxu0 %v67
    %285 = vmatprep.subr.mxu0 0.0
    %286 = vmatpush1.msra.mxu0 %v66
    %287 = vmatprep.subr.mxu0 0.0
    %288 = vmatpush1.msra.mxu0 %v65
    %289 = vmatprep.subr.mxu0 0.0
    %290 = vmatpush1.msra.mxu0 %v64
    %291 = vmatprep.subr.mxu0 0.0
    %292 = vmatpush1.msra.mxu0 %v63
    %293 = vmatprep.subr.mxu0 0.0
    %294 = vmatpush1.msra.mxu0 %v62
    %295 = vmatprep.subr.mxu0 0.0
    %296 = vmatpush2.msra.mxu0 0.0
    %297 = vmatprep.subr.mxu0 0.0
    %298 = vmatpush2.msra.mxu0 0.0
    %299 = vmatprep.subr.mxu0 0.0
    %300 = vmatpush2.msra.mxu0 0.0
    %301 = vmatprep.subr.mxu0 0.0
    %302 = vmatpush2.msra.mxu0 0.0
    %303 = vmatprep.subr.mxu0 0.0
    %304 = vmatpush2.msra.mxu0 0.0
    %305 = vmatprep.subr.mxu0 0.0
    %306 = vmatpush2.msra.mxu0 0.0
    %307 = vmatprep.subr.mxu0 0.0
    %308 = vmatpush2.msra.mxu0 0.0
    %309 = vmatprep.subr.mxu0 0.0
    %310 = vmatpush2.msra.mxu0 0.0
    %311 = vmatprep.subr.mxu0 0.0
    %312 = vmatpush2.msra.mxu0 0.0
    %313 = vmatprep.subr.mxu0 0.0
    %314 = vmatpush2.msra.mxu0 0.0
    %315 = vmatprep.subr.mxu0 0.0
    %316 = vmatpush2.msra.mxu0 0.0
    %317 = vmatprep.subr.mxu0 0.0
    %318 = vmatpush2.msra.mxu0 0.0
    %319 = vmatprep.subr.mxu0 0.0
    %320 = vmatpush2.msra.mxu0 0.0
    %321 = vmatprep.subr.mxu0 0.0
    %322 = vmatpush2.msra.mxu0 0.0
    %323 = vmatprep.subr.mxu0 0.0
    %324 = vmatpush2.msra.mxu0 0.0
    %325 = vmatprep.subr.mxu0 0.0
    %326 = vmatpush2.msra.mxu0 0.0
    %327 = vmatprep.mubr.f32.mxu0 0.0
    %328 = vmatmul.mubr.f32.gmra.mxu0 %v86
    %v329 = vpop.f32.mrf.mxu0
    %v330 = vadd.f32 %v185, %v329
    %v331 = vpop.f32.mrf.mxu0
    %332 = vmatprep.mubr.f32.mxu0 0.0
    %333 = vmatmul.mubr.f32.gmra.mxu0 %v87
    %v334 = vpop.f32.mrf.mxu0
    %v335 = vadd.f32 %v190, %v334
    %v336 = vpop.f32.mrf.mxu0
    %337 = vmatprep.mubr.f32.mxu0 0.0
    %338 = vmatmul.mubr.f32.gmra.mxu0 %v88
    %v339 = vpop.f32.mrf.mxu0
    %v340 = vadd.f32 %v195, %v339
    %v341 = vpop.f32.mrf.mxu0
    %342 = vmatprep.mubr.f32.mxu0 0.0
    %343 = vmatmul.mubr.f32.gmra.mxu0 %v89
    %v344 = vpop.f32.mrf.mxu0
    %v345 = vadd.f32 %v200, %v344
    %v346 = vpop.f32.mrf.mxu0
    %347 = vmatprep.mubr.f32.mxu0 0.0
    %348 = vmatmul.mubr.f32.gmra.mxu0 %v90
    %v349 = vpop.f32.mrf.mxu0
    %v350 = vadd.f32 %v205, %v349
    %v351 = vpop.f32.mrf.mxu0
    %352 = vmatprep.mubr.f32.mxu0 0.0
    %353 = vmatmul.mubr.f32.gmra.mxu0 %v91
    %v354 = vpop.f32.mrf.mxu0
    %v355 = vadd.f32 %v210, %v354
    %v356 = vpop.f32.mrf.mxu0
    %357 = vmatprep.mubr.f32.mxu0 0.0
    %358 = vmatmul.mubr.f32.gmra.mxu0 %v92
    %v359 = vpop.f32.mrf.mxu0
    %v360 = vadd.f32 %v215, %v359
    %v361 = vpop.f32.mrf.mxu0
    %362 = vmatprep.mubr.f32.mxu0 0.0
    %363 = vmatmul.mubr.f32.gmra.mxu0 %v93
    %v364 = vpop.f32.mrf.mxu0
    %v365 = vadd.f32 %v220, %v364
    %v366 = vpop.f32.mrf.mxu0
    %367 = vmatprep.mubr.f32.mxu0 0.0
    %368 = vmatmul.mubr.f32.gmra.mxu0 %v94
    %v369 = vpop.f32.mrf.mxu0
    %v370 = vadd.f32 %v225, %v369
    %v371 = vpop.f32.mrf.mxu0
    %372 = vmatprep.mubr.f32.mxu0 0.0
    %373 = vmatmul.mubr.f32.gmra.mxu0 %v95
    %v374 = vpop.f32.mrf.mxu0
    %v375 = vadd.f32 %v230, %v374
    %v376 = vpop.f32.mrf.mxu0
    %377 = vmatprep.mubr.f32.mxu0 0.0
    %378 = vmatmul.mubr.f32.gmra.mxu0 %v96
    %v379 = vpop.f32.mrf.mxu0
    %v380 = vadd.f32 %v235, %v379
    %v381 = vpop.f32.mrf.mxu0
    %382 = vmatprep.mubr.f32.mxu0 0.0
    %383 = vmatmul.mubr.f32.gmra.mxu0 %v97
    %v384 = vpop.f32.mrf.mxu0
    %v385 = vadd.f32 %v240, %v384
    %v386 = vpop.f32.mrf.mxu0
    %387 = vmatprep.mubr.f32.mxu0 0.0
    %388 = vmatmul.mubr.f32.gmra.mxu0 %v98
    %v389 = vpop.f32.mrf.mxu0
    %v390 = vadd.f32 %v245, %v389
    %v391 = vpop.f32.mrf.mxu0
    %392 = vmatprep.mubr.f32.mxu0 0.0
    %393 = vmatmul.mubr.f32.gmra.mxu0 %v99
    %v394 = vpop.f32.mrf.mxu0
    %v395 = vadd.f32 %v250, %v394
    %v396 = vpop.f32.mrf.mxu0
    %397 = vmatprep.mubr.f32.mxu0 0.0
    %398 = vmatmul.mubr.f32.gmra.mxu0 %v100
    %v399 = vpop.f32.mrf.mxu0
    %v400 = vadd.f32 %v255, %v399
    %v401 = vpop.f32.mrf.mxu0
    %402 = vmatprep.mubr.f32.mxu0 0.0
    %403 = vmatmul.mubr.f32.gmra.mxu0 %v101
    %v404 = vpop.f32.mrf.mxu0
    %v405 = vadd.f32 %v260, %v404
    %v406 = vpop.f32.mrf.mxu0
    %407 = vdwg.mxu0
    %v408 = vmul.f32 %v330, 0.03125
    %v409 = vmul.f32 %v335, 0.03125
    %v410 = vmul.f32 %v340, 0.03125
    %v411 = vmul.f32 %v345, 0.03125
    %v412 = vmul.f32 %v350, 0.03125
    %v413 = vmul.f32 %v355, 0.03125
    %v414 = vmul.f32 %v360, 0.03125
    %v415 = vmul.f32 %v365, 0.03125
    %v416 = vmul.f32 %v370, 0.03125
    %v417 = vmul.f32 %v375, 0.03125
    %v418 = vmul.f32 %v380, 0.03125
    %v419 = vmul.f32 %v385, 0.03125
    %v420 = vmul.f32 %v390, 0.03125
    %v421 = vmul.f32 %v395, 0.03125
    %v422 = vmul.f32 %v400, 0.03125
    %v423 = vmul.f32 %v405, 0.03125
    %v424 = vsub.f32 %v46, %v408
    %v425 = vsub.f32 %v47, %v409
    %v426 = vsub.f32 %v48, %v410
    %v427 = vsub.f32 %v49, %v411
    %v428 = vsub.f32 %v50, %v412
    %v429 = vsub.f32 %v51, %v413
    %v430 = vsub.f32 %v52, %v414
    %v431 = vsub.f32 %v53, %v415
    %v432 = vsub.f32 %v54, %v416
    %v433 = vsub.f32 %v55, %v417
    %v434 = vsub.f32 %v56, %v418
    %v435 = vsub.f32 %v57, %v419
    %v436 = vsub.f32 %v58, %v420
    %v437 = vsub.f32 %v59, %v421
    %v438 = vsub.f32 %v60, %v422
    %v439 = vsub.f32 %v61, %v423
    %v440 = vmul.f32 %v424, %v424
    %v441 = vmul.f32 %v425, %v425
    %v442 = vmul.f32 %v426, %v426
    %v443 = vmul.f32 %v427, %v427
    %v444 = vmul.f32 %v428, %v428
    %v445 = vmul.f32 %v429, %v429
    %v446 = vmul.f32 %v430, %v430
    %v447 = vmul.f32 %v431, %v431
    %v448 = vmul.f32 %v432, %v432
    %v449 = vmul.f32 %v433, %v433
    %v450 = vmul.f32 %v434, %v434
    %v451 = vmul.f32 %v435, %v435
    %v452 = vmul.f32 %v436, %v436
    %v453 = vmul.f32 %v437, %v437
    %v454 = vmul.f32 %v438, %v438
    %v455 = vmul.f32 %v439, %v439
    %v456 = vpack.c.bf16 %v441, %v440
    %v457 = vpack.c.bf16 %v443, %v442
    %v458 = vpack.c.bf16 %v445, %v444
    %v459 = vpack.c.bf16 %v447, %v446
    %v460 = vpack.c.bf16 %v449, %v448
    %v461 = vpack.c.bf16 %v451, %v450
    %v462 = vpack.c.bf16 %v453, %v452
    %v463 = vpack.c.bf16 %v455, %v454
    %v464 = vunpack.c.l.bf16 %v456
    %v465 = vunpack.c.h.bf16 %v456
    %v466 = vunpack.c.l.bf16 %v457
    %v467 = vunpack.c.h.bf16 %v457
    %v468 = vunpack.c.l.bf16 %v458
    %v469 = vunpack.c.h.bf16 %v458
    %v470 = vunpack.c.l.bf16 %v459
    %v471 = vunpack.c.h.bf16 %v459
    %v472 = vunpack.c.l.bf16 %v460
    %v473 = vunpack.c.h.bf16 %v460
    %v474 = vunpack.c.l.bf16 %v461
    %v475 = vunpack.c.h.bf16 %v461
    %v476 = vunpack.c.l.bf16 %v462
    %v477 = vunpack.c.h.bf16 %v462
    %v478 = vunpack.c.l.bf16 %v463
    %v479 = vunpack.c.h.bf16 %v463
    %v480 = vsub.f32 %v440, %v464
    %v481 = vsub.f32 %v441, %v465
    %v482 = vsub.f32 %v442, %v466
    %v483 = vsub.f32 %v443, %v467
    %v484 = vsub.f32 %v444, %v468
    %v485 = vsub.f32 %v445, %v469
    %v486 = vsub.f32 %v446, %v470
    %v487 = vsub.f32 %v447, %v471
    %v488 = vsub.f32 %v448, %v472
    %v489 = vsub.f32 %v449, %v473
    %v490 = vsub.f32 %v450, %v474
    %v491 = vsub.f32 %v451, %v475
    %v492 = vsub.f32 %v452, %v476
    %v493 = vsub.f32 %v453, %v477
    %v494 = vsub.f32 %v454, %v478
    %v495 = vsub.f32 %v455, %v479
    %496 = vmatprep.subr.mxu0 0.0
    %497 = vmatpush1.msra.mxu0 %v77
    %498 = vmatprep.subr.mxu0 0.0
    %499 = vmatpush1.msra.mxu0 %v76
    %500 = vmatprep.subr.mxu0 0.0
    %501 = vmatpush1.msra.mxu0 %v75
    %502 = vmatprep.subr.mxu0 0.0
    %503 = vmatpush1.msra.mxu0 %v74
    %504 = vmatprep.subr.mxu0 0.0
    %505 = vmatpush1.msra.mxu0 %v73
    %506 = vmatprep.subr.mxu0 0.0
    %507 = vmatpush1.msra.mxu0 %v72
    %508 = vmatprep.subr.mxu0 0.0
    %509 = vmatpush1.msra.mxu0 %v71
    %510 = vmatprep.subr.mxu0 0.0
    %511 = vmatpush1.msra.mxu0 %v70
    %512 = vmatprep.subr.mxu0 0.0
    %513 = vmatpush1.msra.mxu0 %v69
    %514 = vmatprep.subr.mxu0 0.0
    %515 = vmatpush1.msra.mxu0 %v68
    %516 = vmatprep.subr.mxu0 0.0
    %517 = vmatpush1.msra.mxu0 %v67
    %518 = vmatprep.subr.mxu0 0.0
    %519 = vmatpush1.msra.mxu0 %v66
    %520 = vmatprep.subr.mxu0 0.0
    %521 = vmatpush1.msra.mxu0 %v65
    %522 = vmatprep.subr.mxu0 0.0
    %523 = vmatpush1.msra.mxu0 %v64
    %524 = vmatprep.subr.mxu0 0.0
    %525 = vmatpush1.msra.mxu0 %v63
    %526 = vmatprep.subr.mxu0 0.0
    %527 = vmatpush1.msra.mxu0 %v62
    %528 = vmatprep.subr.mxu0 0.0
    %529 = vmatpush2.msra.mxu0 0.0
    %530 = vmatprep.subr.mxu0 0.0
    %531 = vmatpush2.msra.mxu0 0.0
    %532 = vmatprep.subr.mxu0 0.0
    %533 = vmatpush2.msra.mxu0 0.0
    %534 = vmatprep.subr.mxu0 0.0
    %535 = vmatpush2.msra.mxu0 0.0
    %536 = vmatprep.subr.mxu0 0.0
    %537 = vmatpush2.msra.mxu0 0.0
    %538 = vmatprep.subr.mxu0 0.0
    %539 = vmatpush2.msra.mxu0 0.0
    %540 = vmatprep.subr.mxu0 0.0
    %541 = vmatpush2.msra.mxu0 0.0
    %542 = vmatprep.subr.mxu0 0.0
    %543 = vmatpush2.msra.mxu0 0.0
    %544 = vmatprep.subr.mxu0 0.0
    %545 = vmatpush2.msra.mxu0 0.0
    %546 = vmatprep.subr.mxu0 0.0
    %547 = vmatpush2.msra.mxu0 0.0
    %548 = vmatprep.subr.mxu0 0.0
    %549 = vmatpush2.msra.mxu0 0.0
    %550 = vmatprep.subr.mxu0 0.0
    %551 = vmatpush2.msra.mxu0 0.0
    %552 = vmatprep.subr.mxu0 0.0
    %553 = vmatpush2.msra.mxu0 0.0
    %554 = vmatprep.subr.mxu0 0.0
    %555 = vmatpush2.msra.mxu0 0.0
    %556 = vmatprep.subr.mxu0 0.0
    %557 = vmatpush2.msra.mxu0 0.0
    %558 = vmatprep.subr.mxu0 0.0
    %559 = vmatpush2.msra.mxu0 0.0
    %560 = vmatprep.mubr.f32.mxu0 0.0
    %561 = vmatmul.mubr.f32.gmra.mxu0 %v480
    %v562 = vpop.f32.mrf.mxu0
    %v563 = vadd.f32 0.0, %v562
    %v564 = vpop.f32.mrf.mxu0
    %565 = vmatprep.mubr.f32.mxu0 0.0
    %566 = vmatmul.mubr.f32.gmra.mxu0 %v481
    %v567 = vpop.f32.mrf.mxu0
    %v568 = vadd.f32 0.0, %v567
    %v569 = vpop.f32.mrf.mxu0
    %570 = vmatprep.mubr.f32.mxu0 0.0
    %571 = vmatmul.mubr.f32.gmra.mxu0 %v482
    %v572 = vpop.f32.mrf.mxu0
    %v573 = vadd.f32 0.0, %v572
    %v574 = vpop.f32.mrf.mxu0
    %575 = vmatprep.mubr.f32.mxu0 0.0
    %576 = vmatmul.mubr.f32.gmra.mxu0 %v483
    %v577 = vpop.f32.mrf.mxu0
    %v578 = vadd.f32 0.0, %v577
    %v579 = vpop.f32.mrf.mxu0
    %580 = vmatprep.mubr.f32.mxu0 0.0
    %581 = vmatmul.mubr.f32.gmra.mxu0 %v484
    %v582 = vpop.f32.mrf.mxu0
    %v583 = vadd.f32 0.0, %v582
    %v584 = vpop.f32.mrf.mxu0
    %585 = vmatprep.mubr.f32.mxu0 0.0
    %586 = vmatmul.mubr.f32.gmra.mxu0 %v485
    %v587 = vpop.f32.mrf.mxu0
    %v588 = vadd.f32 0.0, %v587
    %v589 = vpop.f32.mrf.mxu0
    %590 = vmatprep.mubr.f32.mxu0 0.0
    %591 = vmatmul.mubr.f32.gmra.mxu0 %v486
    %v592 = vpop.f32.mrf.mxu0
    %v593 = vadd.f32 0.0, %v592
    %v594 = vpop.f32.mrf.mxu0
    %595 = vmatprep.mubr.f32.mxu0 0.0
    %596 = vmatmul.mubr.f32.gmra.mxu0 %v487
    %v597 = vpop.f32.mrf.mxu0
    %v598 = vadd.f32 0.0, %v597
    %v599 = vpop.f32.mrf.mxu0
    %600 = vmatprep.mubr.f32.mxu0 0.0
    %601 = vmatmul.mubr.f32.gmra.mxu0 %v488
    %v602 = vpop.f32.mrf.mxu0
    %v603 = vadd.f32 0.0, %v602
    %v604 = vpop.f32.mrf.mxu0
    %605 = vmatprep.mubr.f32.mxu0 0.0
    %606 = vmatmul.mubr.f32.gmra.mxu0 %v489
    %v607 = vpop.f32.mrf.mxu0
    %v608 = vadd.f32 0.0, %v607
    %v609 = vpop.f32.mrf.mxu0
    %610 = vmatprep.mubr.f32.mxu0 0.0
    %611 = vmatmul.mubr.f32.gmra.mxu0 %v490
    %v612 = vpop.f32.mrf.mxu0
    %v613 = vadd.f32 0.0, %v612
    %v614 = vpop.f32.mrf.mxu0
    %615 = vmatprep.mubr.f32.mxu0 0.0
    %616 = vmatmul.mubr.f32.gmra.mxu0 %v491
    %v617 = vpop.f32.mrf.mxu0
    %v618 = vadd.f32 0.0, %v617
    %v619 = vpop.f32.mrf.mxu0
    %620 = vmatprep.mubr.f32.mxu0 0.0
    %621 = vmatmul.mubr.f32.gmra.mxu0 %v492
    %v622 = vpop.f32.mrf.mxu0
    %v623 = vadd.f32 0.0, %v622
    %v624 = vpop.f32.mrf.mxu0
    %625 = vmatprep.mubr.f32.mxu0 0.0
    %626 = vmatmul.mubr.f32.gmra.mxu0 %v493
    %v627 = vpop.f32.mrf.mxu0
    %v628 = vadd.f32 0.0, %v627
    %v629 = vpop.f32.mrf.mxu0
    %630 = vmatprep.mubr.f32.mxu0 0.0
    %631 = vmatmul.mubr.f32.gmra.mxu0 %v494
    %v632 = vpop.f32.mrf.mxu0
    %v633 = vadd.f32 0.0, %v632
    %v634 = vpop.f32.mrf.mxu0
    %635 = vmatprep.mubr.f32.mxu0 0.0
    %636 = vmatmul.mubr.f32.gmra.mxu0 %v495
    %v637 = vpop.f32.mrf.mxu0
    %v638 = vadd.f32 0.0, %v637
    %v639 = vpop.f32.mrf.mxu0
    %640 = vdwg.mxu0
    %641 = vmatprep.subr.mxu0 0.0
    %642 = vmatpush1.msra.mxu0 %v77
    %643 = vmatprep.subr.mxu0 0.0
    %644 = vmatpush1.msra.mxu0 %v76
    %645 = vmatprep.subr.mxu0 0.0
    %646 = vmatpush1.msra.mxu0 %v75
    %647 = vmatprep.subr.mxu0 0.0
    %648 = vmatpush1.msra.mxu0 %v74
    %649 = vmatprep.subr.mxu0 0.0
    %650 = vmatpush1.msra.mxu0 %v73
    %651 = vmatprep.subr.mxu0 0.0
    %652 = vmatpush1.msra.mxu0 %v72
    %653 = vmatprep.subr.mxu0 0.0
    %654 = vmatpush1.msra.mxu0 %v71
    %655 = vmatprep.subr.mxu0 0.0
    %656 = vmatpush1.msra.mxu0 %v70
    %657 = vmatprep.subr.mxu0 0.0
    %658 = vmatpush1.msra.mxu0 %v69
    %659 = vmatprep.subr.mxu0 0.0
    %660 = vmatpush1.msra.mxu0 %v68
    %661 = vmatprep.subr.mxu0 0.0
    %662 = vmatpush1.msra.mxu0 %v67
    %663 = vmatprep.subr.mxu0 0.0
    %664 = vmatpush1.msra.mxu0 %v66
    %665 = vmatprep.subr.mxu0 0.0
    %666 = vmatpush1.msra.mxu0 %v65
    %667 = vmatprep.subr.mxu0 0.0
    %668 = vmatpush1.msra.mxu0 %v64
    %669 = vmatprep.subr.mxu0 0.0
    %670 = vmatpush1.msra.mxu0 %v63
    %671 = vmatprep.subr.mxu0 0.0
    %672 = vmatpush1.msra.mxu0 %v62
    %673 = vmatprep.subr.mxu0 0.0
    %674 = vmatpush2.msra.mxu0 0.0
    %675 = vmatprep.subr.mxu0 0.0
    %676 = vmatpush2.msra.mxu0 0.0
    %677 = vmatprep.subr.mxu0 0.0
    %678 = vmatpush2.msra.mxu0 0.0
    %679 = vmatprep.subr.mxu0 0.0
    %680 = vmatpush2.msra.mxu0 0.0
    %681 = vmatprep.subr.mxu0 0.0
    %682 = vmatpush2.msra.mxu0 0.0
    %683 = vmatprep.subr.mxu0 0.0
    %684 = vmatpush2.msra.mxu0 0.0
    %685 = vmatprep.subr.mxu0 0.0
    %686 = vmatpush2.msra.mxu0 0.0
    %687 = vmatprep.subr.mxu0 0.0
    %688 = vmatpush2.msra.mxu0 0.0
    %689 = vmatprep.subr.mxu0 0.0
    %690 = vmatpush2.msra.mxu0 0.0
    %691 = vmatprep.subr.mxu0 0.0
    %692 = vmatpush2.msra.mxu0 0.0
    %693 = vmatprep.subr.mxu0 0.0
    %694 = vmatpush2.msra.mxu0 0.0
    %695 = vmatprep.subr.mxu0 0.0
    %696 = vmatpush2.msra.mxu0 0.0
    %697 = vmatprep.subr.mxu0 0.0
    %698 = vmatpush2.msra.mxu0 0.0
    %699 = vmatprep.subr.mxu0 0.0
    %700 = vmatpush2.msra.mxu0 0.0
    %701 = vmatprep.subr.mxu0 0.0
    %702 = vmatpush2.msra.mxu0 0.0
    %703 = vmatprep.subr.mxu0 0.0
    %704 = vmatpush2.msra.mxu0 0.0
    %705 = vmatprep.mubr.f32.mxu0 0.0
    %706 = vmatmul.mubr.f32.gmra.mxu0 %v464
    %v707 = vpop.f32.mrf.mxu0
    %v708 = vadd.f32 %v563, %v707
    %v709 = vpop.f32.mrf.mxu0
    %710 = vmatprep.mubr.f32.mxu0 0.0
    %711 = vmatmul.mubr.f32.gmra.mxu0 %v465
    %v712 = vpop.f32.mrf.mxu0
    %v713 = vadd.f32 %v568, %v712
    %v714 = vpop.f32.mrf.mxu0
    %715 = vmatprep.mubr.f32.mxu0 0.0
    %716 = vmatmul.mubr.f32.gmra.mxu0 %v466
    %v717 = vpop.f32.mrf.mxu0
    %v718 = vadd.f32 %v573, %v717
    %v719 = vpop.f32.mrf.mxu0
    %720 = vmatprep.mubr.f32.mxu0 0.0
    %721 = vmatmul.mubr.f32.gmra.mxu0 %v467
    %v722 = vpop.f32.mrf.mxu0
    %v723 = vadd.f32 %v578, %v722
    %v724 = vpop.f32.mrf.mxu0
    %725 = vmatprep.mubr.f32.mxu0 0.0
    %726 = vmatmul.mubr.f32.gmra.mxu0 %v468
    %v727 = vpop.f32.mrf.mxu0
    %v728 = vadd.f32 %v583, %v727
    %v729 = vpop.f32.mrf.mxu0
    %730 = vmatprep.mubr.f32.mxu0 0.0
    %731 = vmatmul.mubr.f32.gmra.mxu0 %v469
    %v732 = vpop.f32.mrf.mxu0
    %v733 = vadd.f32 %v588, %v732
    %v734 = vpop.f32.mrf.mxu0
    %735 = vmatprep.mubr.f32.mxu0 0.0
    %736 = vmatmul.mubr.f32.gmra.mxu0 %v470
    %v737 = vpop.f32.mrf.mxu0
    %v738 = vadd.f32 %v593, %v737
    %v739 = vpop.f32.mrf.mxu0
    %740 = vmatprep.mubr.f32.mxu0 0.0
    %741 = vmatmul.mubr.f32.gmra.mxu0 %v471
    %v742 = vpop.f32.mrf.mxu0
    %v743 = vadd.f32 %v598, %v742
    %v744 = vpop.f32.mrf.mxu0
    %745 = vmatprep.mubr.f32.mxu0 0.0
    %746 = vmatmul.mubr.f32.gmra.mxu0 %v472
    %v747 = vpop.f32.mrf.mxu0
    %v748 = vadd.f32 %v603, %v747
    %v749 = vpop.f32.mrf.mxu0
    %750 = vmatprep.mubr.f32.mxu0 0.0
    %751 = vmatmul.mubr.f32.gmra.mxu0 %v473
    %v752 = vpop.f32.mrf.mxu0
    %v753 = vadd.f32 %v608, %v752
    %v754 = vpop.f32.mrf.mxu0
    %755 = vmatprep.mubr.f32.mxu0 0.0
    %756 = vmatmul.mubr.f32.gmra.mxu0 %v474
    %v757 = vpop.f32.mrf.mxu0
    %v758 = vadd.f32 %v613, %v757
    %v759 = vpop.f32.mrf.mxu0
    %760 = vmatprep.mubr.f32.mxu0 0.0
    %761 = vmatmul.mubr.f32.gmra.mxu0 %v475
    %v762 = vpop.f32.mrf.mxu0
    %v763 = vadd.f32 %v618, %v762
    %v764 = vpop.f32.mrf.mxu0
    %765 = vmatprep.mubr.f32.mxu0 0.0
    %766 = vmatmul.mubr.f32.gmra.mxu0 %v476
    %v767 = vpop.f32.mrf.mxu0
    %v768 = vadd.f32 %v623, %v767
    %v769 = vpop.f32.mrf.mxu0
    %770 = vmatprep.mubr.f32.mxu0 0.0
    %771 = vmatmul.mubr.f32.gmra.mxu0 %v477
    %v772 = vpop.f32.mrf.mxu0
    %v773 = vadd.f32 %v628, %v772
    %v774 = vpop.f32.mrf.mxu0
    %775 = vmatprep.mubr.f32.mxu0 0.0
    %776 = vmatmul.mubr.f32.gmra.mxu0 %v478
    %v777 = vpop.f32.mrf.mxu0
    %v778 = vadd.f32 %v633, %v777
    %v779 = vpop.f32.mrf.mxu0
    %780 = vmatprep.mubr.f32.mxu0 0.0
    %781 = vmatmul.mubr.f32.gmra.mxu0 %v479
    %v782 = vpop.f32.mrf.mxu0
    %v783 = vadd.f32 %v638, %v782
    %v784 = vpop.f32.mrf.mxu0
    %785 = vdwg.mxu0
    %v786 = vmul.f32 %v708, 0.03125
    %v787 = vmul.f32 %v713, 0.03125
    %v788 = vmul.f32 %v718, 0.03125
    %v789 = vmul.f32 %v723, 0.03125
    %v790 = vmul.f32 %v728, 0.03125
    %v791 = vmul.f32 %v733, 0.03125
    %v792 = vmul.f32 %v738, 0.03125
    %v793 = vmul.f32 %v743, 0.03125
    %v794 = vmul.f32 %v748, 0.03125
    %v795 = vmul.f32 %v753, 0.03125
    %v796 = vmul.f32 %v758, 0.03125
    %v797 = vmul.f32 %v763, 0.03125
    %v798 = vmul.f32 %v768, 0.03125
    %v799 = vmul.f32 %v773, 0.03125
    %v800 = vmul.f32 %v778, 0.03125
    %v801 = vmul.f32 %v783, 0.03125
    %v802 = vadd.f32 %v786, 1e-06
    %v803 = vadd.f32 %v787, 1e-06
    %v804 = vadd.f32 %v788, 1e-06
    %v805 = vadd.f32 %v789, 1e-06
    %v806 = vadd.f32 %v790, 1e-06
    %v807 = vadd.f32 %v791, 1e-06
    %v808 = vadd.f32 %v792, 1e-06
    %v809 = vadd.f32 %v793, 1e-06
    %v810 = vadd.f32 %v794, 1e-06
    %v811 = vadd.f32 %v795, 1e-06
    %v812 = vadd.f32 %v796, 1e-06
    %v813 = vadd.f32 %v797, 1e-06
    %v814 = vadd.f32 %v798, 1e-06
    %v815 = vadd.f32 %v799, 1e-06
    %v816 = vadd.f32 %v800, 1e-06
    %v817 = vadd.f32 %v801, 1e-06
    %v818 = vrsqrt.pop %v802
    %v819 = vrsqrt.pop %v803
    %v820 = vrsqrt.pop %v804
    %v821 = vrsqrt.pop %v805
    %v822 = vrsqrt.pop %v806
    %v823 = vrsqrt.pop %v807
    %v824 = vrsqrt.pop %v808
    %v825 = vrsqrt.pop %v809
    %v826 = vrsqrt.pop %v810
    %v827 = vrsqrt.pop %v811
    %v828 = vrsqrt.pop %v812
    %v829 = vrsqrt.pop %v813
    %v830 = vrsqrt.pop %v814
    %v831 = vrsqrt.pop %v815
    %v832 = vrsqrt.pop %v816
    %v833 = vrsqrt.pop %v817
    %v834 = vmul.f32 %v424, %v818
    %v835 = vmul.f32 %v425, %v819
    %v836 = vmul.f32 %v426, %v820
    %v837 = vmul.f32 %v427, %v821
    %v838 = vmul.f32 %v428, %v822
    %v839 = vmul.f32 %v429, %v823
    %v840 = vmul.f32 %v430, %v824
    %v841 = vmul.f32 %v431, %v825
    %v842 = vmul.f32 %v432, %v826
    %v843 = vmul.f32 %v433, %v827
    %v844 = vmul.f32 %v434, %v828
    %v845 = vmul.f32 %v435, %v829
    %v846 = vmul.f32 %v436, %v830
    %v847 = vmul.f32 %v437, %v831
    %v848 = vmul.f32 %v438, %v832
    %v849 = vmul.f32 %v439, %v833
    %v850 = vld [vmem:[%s1] sm:$0x1]
    %v852 = vlaneseq
    %v853 = vshrl.u32 %v852, 7
    %v854 = vsub.s32 0, %v853
    %v855 = vrot.slane %v850, %v854
    %v857 = vmul.f32 %v834, %v855
    %v858 = vmul.f32 %v835, %v855
    %v859 = vmul.f32 %v836, %v855
    %v860 = vmul.f32 %v837, %v855
    %v861 = vmul.f32 %v838, %v855
    %v862 = vmul.f32 %v839, %v855
    %v863 = vmul.f32 %v840, %v855
    %v864 = vmul.f32 %v841, %v855
    %v865 = vmul.f32 %v842, %v855
    %v866 = vmul.f32 %v843, %v855
    %v867 = vmul.f32 %v844, %v855
    %v868 = vmul.f32 %v845, %v855
    %v869 = vmul.f32 %v846, %v855
    %v870 = vmul.f32 %v847, %v855
    %v871 = vmul.f32 %v848, %v855
    %v872 = vmul.f32 %v849, %v855
    %v873 = vld [vmem:[%s2] sm:$0x1]
    %v875 = vlaneseq
    %v876 = vshrl.u32 %v875, 7
    %v877 = vsub.s32 0, %v876
    %v878 = vrot.slane %v873, %v877
    %v880 = vadd.f32 %v857, %v878
    %v881 = vadd.f32 %v858, %v878
    %v882 = vadd.f32 %v859, %v878
    %v883 = vadd.f32 %v860, %v878
    %v884 = vadd.f32 %v861, %v878
    %v885 = vadd.f32 %v862, %v878
    %v886 = vadd.f32 %v863, %v878
    %v887 = vadd.f32 %v864, %v878
    %v888 = vadd.f32 %v865, %v878
    %v889 = vadd.f32 %v866, %v878
    %v890 = vadd.f32 %v867, %v878
    %v891 = vadd.f32 %v868, %v878
    %v892 = vadd.f32 %v869, %v878
    %v893 = vadd.f32 %v870, %v878
    %v894 = vadd.f32 %v871, %v878
    %v895 = vadd.f32 %v872, %v878
    %896 = vst [vmem:[#allocation7] sm:$0xff] %v880
    %897 = vst [vmem:[#allocation7 + $0x8] sm:$0xff] %v881
    %898 = vst [vmem:[#allocation7 + $0x10] sm:$0xff] %v882
    %899 = vst [vmem:[#allocation7 + $0x18] sm:$0xff] %v883
    %900 = vst [vmem:[#allocation7 + $0x20] sm:$0xff] %v884
    %901 = vst [vmem:[#allocation7 + $0x28] sm:$0xff] %v885
    %902 = vst [vmem:[#allocation7 + $0x30] sm:$0xff] %v886
    %903 = vst [vmem:[#allocation7 + $0x38] sm:$0xff] %v887
    %904 = vst [vmem:[#allocation7 + $0x40] sm:$0xff] %v888
    %905 = vst [vmem:[#allocation7 + $0x48] sm:$0xff] %v889
    %906 = vst [vmem:[#allocation7 + $0x50] sm:$0xff] %v890
    %907 = vst [vmem:[#allocation7 + $0x58] sm:$0xff] %v891
    %908 = vst [vmem:[#allocation7 + $0x60] sm:$0xff] %v892
    %909 = vst [vmem:[#allocation7 + $0x68] sm:$0xff] %v893
    %910 = vst [vmem:[#allocation7 + $0x70] sm:$0xff] %v894
    %911 = vst [vmem:[#allocation7 + $0x78] sm:$0xff] %v895
    // Predicated region
    $region26: #{tpu_custom_call.1} parent=1 // pred_check
      _
    $region27: #{tpu_custom_call.1} parent=1 // pred_check_branch
      %913 = sbr.rel (0) target = $region29
    $region28: #{tpu_custom_call.1} parent=1 // pred_region
      %s915 = ssub.s32 2048, 2048
      %916 = vsyncadd [#allocation4], %s915
      %s917 = sshll.u32 [#allocation7], 4
      %s918 = int_to_ptr.vmem [resolvable:$true] %s917
      %923 = dma.vmem_to_hbm [thread:$0]  %s918, 2048, %s4, [#allocation4], 128, 128, 8
    $region29: #{tpu_custom_call.1} parent=1 // pred_fallthru
      _
    // Predicated region
    $region30: #{tpu_custom_call.1} parent=1 // pred_check
      _
    $region31: #{tpu_custom_call.1} parent=1 // pred_check_branch
      %925 = sbr.rel (0) target = $region33
    $region32: #{tpu_custom_call.1} parent=1 // pred_region
      %926 = dma.done [#allocation4], 2048
    $region33: #{tpu_custom_call.1} parent=1 // pred_fallthru
      _
    %927 = vsyncpa [#allocation3], 1
    %928 = vsyncpa [#allocation6], 1
    %929 = vsyncpa [#allocation4], 1

</llo_original>
